<compile_context>
chip_gen: v6e
topology: v6e:2x2x1
jax: 0.10.0
libtpu: 0.0.40
codegen_flags: <defaults>
</compile_context>

<pallas_src>
import jax
import jax.numpy as jnp
from jax.experimental import pallas as pl
from jax.experimental.pallas import tpu as pltpu

LANES = 128
MAX_TILE_ROWS = 512       # tile = (512, 128) f32 = 256 KiB -> ~85% HBM roofline
NUM_SLICES = 2            # megacore split (v7x); also correct on 1-TC chips
_PAD_LOGIT = -1e4         # sigmoid(pad) == 0 and BCE(pad, target=0) == 0 exactly


def _round_up(x, m):
    return ((x + m - 1) // m) * m


def _dice_bce_kernel(pred_ref, targ_ref, partial_ref, acc_ref):
    j = pl.program_id(1)

    @pl.when(j == 0)
    def _init():
        acc_ref[...] = jnp.zeros_like(acc_ref)

    x = pred_ref[...].astype(jnp.float32)
    t = targ_ref[...].astype(jnp.float32)

    # Numerically stable BCE-with-logits and sigmoid, sharing a single exp:
    #   e = exp(-|x|)
    #   bce = max(x, 0) - x*t + log1p(e)
    #   sigmoid(x) = where(x >= 0, 1, e) / (1 + e)
    e = jnp.exp(-jnp.abs(x))
    bce = jnp.maximum(x, 0.0) - x * t + jnp.log1p(e)
    sig = jnp.where(x >= 0.0, 1.0, e) / (1.0 + e)

    # Pure element-wise (VPU) accumulation; reductions deferred to finalize.
    acc_ref[0] += bce            # sum of per-element BCE
    acc_ref[1] += sig * t        # intersection
    acc_ref[2] += sig + t        # union (fused sum(sig) + sum(t))

    @pl.when(j == pl.num_programs(1) - 1)
    def _finalize():
        # One cross-lane/sublane reduction per accumulator, once per slice.
        partial_ref[0, 0] = jnp.full((8, LANES), jnp.sum(acc_ref[0]), jnp.float32)
        partial_ref[0, 1] = jnp.full((8, LANES), jnp.sum(acc_ref[1]), jnp.float32)
        partial_ref[0, 2] = jnp.full((8, LANES), jnp.sum(acc_ref[2]), jnp.float32)


def dice_bce_loss(pred, target):
    """Combined BCEWithLogits (mean) + Dice loss (smooth=1e-7). Scalar f32."""
    assert pred.shape == target.shape
    n_valid = int(pred.size)

    flat_pred = jnp.ravel(pred)      # native dtype; cast happens in-kernel
    flat_targ = jnp.ravel(target)

    rows_total = int(pl.cdiv(n_valid, LANES))
    num_slices = NUM_SLICES if rows_total >= NUM_SLICES * 8 else 1
    tile_rows = int(min(MAX_TILE_ROWS,
                        _round_up(int(pl.cdiv(rows_total, num_slices)), 8)))
    tiles_per_slice = int(pl.cdiv(rows_total, num_slices * tile_rows))
    padded_rows = num_slices * tiles_per_slice * tile_rows
    pad = padded_rows * LANES - n_valid
    if pad:
        # TODO(synk): for huge ragged inputs an in-kernel tail mask would avoid
        # this full-array rewrite; sentinel values make pad elements contribute
        # exactly zero to all accumulated sums, so no mask stream is needed.
        flat_pred = jnp.pad(flat_pred, (0, pad), constant_values=_PAD_LOGIT)
        flat_targ = jnp.pad(flat_targ, (0, pad), constant_values=0)

    pred2d = flat_pred.reshape(padded_rows, LANES)
    targ2d = flat_targ.reshape(padded_rows, LANES)

    in_spec = pl.BlockSpec((tile_rows, LANES),
                           lambda i, j: (i * tiles_per_slice + j, 0))
    out_spec = pl.BlockSpec((1, 3, 8, LANES), lambda i, j: (i, 0, 0, 0))

    partials = pl.pallas_call(
        _dice_bce_kernel,
        out_shape=jax.ShapeDtypeStruct((num_slices, 3, 8, LANES), jnp.float32),
        grid_spec=pltpu.PrefetchScalarGridSpec(
            num_scalar_prefetch=0,
            grid=(num_slices, tiles_per_slice),
            in_specs=[in_spec, in_spec],
            out_specs=out_spec,
            scratch_shapes=[pltpu.VMEM((3, tile_rows, LANES), jnp.float32)],
        ),
        compiler_params=pltpu.CompilerParams(
            dimension_semantics=("parallel", "arbitrary")),
    )(pred2d, targ2d)

    # Tiny per-slice combine in plain JAX: [bce_sum, intersection, union].
    sums = partials[:, :, 0, 0].sum(axis=0)
    eps = jnp.float32(1e-07)
    bce_mean = sums[0] / jnp.float32(n_valid)
    dice = 1.0 - (2.0 * sums[1] + eps) / (sums[2] + eps)
    return bce_mean + dice


def _reference(pred, target):
    x = pred.astype(jnp.float32)
    t = target.astype(jnp.float32)
    bce = jnp.mean(jnp.maximum(x, 0.0) - x * t + jnp.log1p(jnp.exp(-jnp.abs(x))))
    s = jax.nn.sigmoid(x)
    inter = jnp.sum(s * t)
    union = jnp.sum(s) + jnp.sum(t)
    dice = 1.0 - (2.0 * inter + 1e-07) / (union + 1e-07)
    return bce + dice


if __name__ == "__main__":
    key = jax.random.PRNGKey(0)
    k1, k2 = jax.random.split(key)
    # NCHW inputs, as the PyTorch module would receive.
    pred = jax.random.normal(k1, (2, 4, 16, 16), dtype=jnp.float32)
    target = (jax.random.uniform(k2, (2, 4, 16, 16)) > 0.5).astype(jnp.float32)

    loss = jax.block_until_ready(dice_bce_loss(pred, target))
    ref = _reference(pred, target)
    assert jnp.allclose(loss, ref, atol=1e-5, rtol=1e-5), (loss, ref)
    print("KERNEL_OK")
</pallas_src>

<mosaic_0001>
module attributes {stable_mosaic.version = 11 : i64} {
  func.func @_dice_bce_kernel(%arg0: i32, %arg1: i32, %arg2: memref<8x128xf32, #tpu.memory_space<vmem>>, %arg3: memref<8x128xf32, #tpu.memory_space<vmem>>, %arg4: memref<1x3x8x128xf32, #tpu.memory_space<vmem>>, %arg5: memref<3x8x128xf32, #tpu.memory_space<vmem>>) attributes {dimension_semantics = [#tpu.dimension_semantics<parallel>, #tpu.dimension_semantics<arbitrary>], iteration_bounds = array<i64: 2, 1>, scalar_prefetch = 0 : i64, scratch_operands = 1 : i64, tpu.core_type = #tpu.core_type<tc>, window_params = [{transform_indices = @transform_0, window_bounds = array<i64: 8, 128>}, {transform_indices = @transform_1, window_bounds = array<i64: 8, 128>}, {transform_indices = @transform_2, window_bounds = array<i64: 1, 3, 8, 128>}]} {
    %c0_i32 = arith.constant 0 : i32
    %0 = arith.cmpi eq, %arg1, %c0_i32 : i32
    %1 = arith.extui %0 : i1 to i32
    %c0_i32_0 = arith.constant 0 : i32
    %2 = arith.cmpi ne, %1, %c0_i32_0 : i32
    scf.if %2 {
      %cst_26 = arith.constant 0.000000e+00 : f32
      %45 = vector.broadcast %cst_26 : f32 to vector<3x8x128xf32>
      %c0_27 = arith.constant 0 : index
      %c0_28 = arith.constant 0 : index
      %c0_29 = arith.constant 0 : index
      %46 = vector.load %arg5[%c0_27, %c0_28, %c0_29] : memref<3x8x128xf32, #tpu.memory_space<vmem>>, vector<3x8x128xf32>
      tpu.vector_store %arg5[%c0_27, %c0_28, %c0_29], %45 {strides = array<i32>} : memref<3x8x128xf32, #tpu.memory_space<vmem>>, vector<3x8x128xf32>,
    } else {
    }
    %c0 = arith.constant 0 : index
    %c0_1 = arith.constant 0 : index
    %3 = vector.load %arg2[%c0, %c0_1] : memref<8x128xf32, #tpu.memory_space<vmem>>, vector<8x128xf32>
    %c0_2 = arith.constant 0 : index
    %c0_3 = arith.constant 0 : index
    %4 = vector.load %arg3[%c0_2, %c0_3] : memref<8x128xf32, #tpu.memory_space<vmem>>, vector<8x128xf32>
    %5 = math.absf %3 : vector<8x128xf32>
    %cst = arith.constant 0.000000e+00 : f32
    %6 = vector.broadcast %cst : f32 to vector<8x128xf32>
    %7 = arith.subf %6, %5 : vector<8x128xf32>
    %8 = math.exp %7 : vector<8x128xf32>
    %cst_4 = arith.constant 0.000000e+00 : f32
    %9 = vector.broadcast %cst_4 : f32 to vector<8x128xf32>
    %10 = arith.maximumf %3, %9 : vector<8x128xf32>
    %11 = arith.mulf %3, %4 : vector<8x128xf32>
    %12 = arith.subf %10, %11 : vector<8x128xf32>
    %13 = math.log1p %8 : vector<8x128xf32>
    %14 = arith.addf %12, %13 : vector<8x128xf32>
    %cst_5 = arith.constant 0.000000e+00 : f32
    %15 = vector.broadcast %cst_5 : f32 to vector<8x128xf32>
    %16 = arith.cmpf oge, %3, %15 : vector<8x128xf32>
    %cst_6 = arith.constant 1.000000e+00 : f32
    %17 = vector.broadcast %cst_6 : f32 to vector<8x128xf32>
    %18 = arith.select %16, %17, %8 : vector<8x128xi1>, vector<8x128xf32>
    %cst_7 = arith.constant 1.000000e+00 : f32
    %19 = vector.broadcast %cst_7 : f32 to vector<8x128xf32>
    %20 = arith.addf %19, %8 : vector<8x128xf32>
    %21 = arith.divf %18, %20 : vector<8x128xf32>
    %c0_8 = arith.constant 0 : index
    %c0_9 = arith.constant 0 : index
    %c0_10 = arith.constant 0 : index
    %22 = vector.load %arg5[%c0_8, %c0_9, %c0_10] : memref<3x8x128xf32, #tpu.memory_space<vmem>>, vector<1x8x128xf32>
    %23 = vector.shape_cast %22 : vector<1x8x128xf32> to vector<8x128xf32>
    %24 = arith.addf %23, %14 : vector<8x128xf32>
    %c0_11 = arith.constant 0 : index
    %c0_12 = arith.constant 0 : index
    %c0_13 = arith.constant 0 : index
    %25 = vector.load %arg5[%c0_11, %c0_12, %c0_13] : memref<3x8x128xf32, #tpu.memory_space<vmem>>, vector<1x8x128xf32>
    %26 = vector.shape_cast %25 : vector<1x8x128xf32> to vector<8x128xf32>
    %27 = vector.shape_cast %24 : vector<8x128xf32> to vector<1x8x128xf32>
    tpu.vector_store %arg5[%c0_11, %c0_12, %c0_13], %27 {strides = array<i32>} : memref<3x8x128xf32, #tpu.memory_space<vmem>>, vector<1x8x128xf32>,
    %c1 = arith.constant 1 : index
    %c0_14 = arith.constant 0 : index
    %c0_15 = arith.constant 0 : index
    %28 = vector.load %arg5[%c1, %c0_14, %c0_15] : memref<3x8x128xf32, #tpu.memory_space<vmem>>, vector<1x8x128xf32>
    %29 = vector.shape_cast %28 : vector<1x8x128xf32> to vector<8x128xf32>
    %30 = arith.mulf %21, %4 : vector<8x128xf32>
    %31 = arith.addf %29, %30 : vector<8x128xf32>
    %c1_16 = arith.constant 1 : index
    %c0_17 = arith.constant 0 : index
    %c0_18 = arith.constant 0 : index
    %32 = vector.load %arg5[%c1_16, %c0_17, %c0_18] : memref<3x8x128xf32, #tpu.memory_space<vmem>>, vector<1x8x128xf32>
    %33 = vector.shape_cast %32 : vector<1x8x128xf32> to vector<8x128xf32>
    %34 = vector.shape_cast %31 : vector<8x128xf32> to vector<1x8x128xf32>
    tpu.vector_store %arg5[%c1_16, %c0_17, %c0_18], %34 {strides = array<i32>} : memref<3x8x128xf32, #tpu.memory_space<vmem>>, vector<1x8x128xf32>,
    %c2 = arith.constant 2 : index
    %c0_19 = arith.constant 0 : index
    %c0_20 = arith.constant 0 : index
    %35 = vector.load %arg5[%c2, %c0_19, %c0_20] : memref<3x8x128xf32, #tpu.memory_space<vmem>>, vector<1x8x128xf32>
    %36 = vector.shape_cast %35 : vector<1x8x128xf32> to vector<8x128xf32>
    %37 = arith.addf %21, %4 : vector<8x128xf32>
    %38 = arith.addf %36, %37 : vector<8x128xf32>
    %c2_21 = arith.constant 2 : index
    %c0_22 = arith.constant 0 : index
    %c0_23 = arith.constant 0 : index
    %39 = vector.load %arg5[%c2_21, %c0_22, %c0_23] : memref<3x8x128xf32, #tpu.memory_space<vmem>>, vector<1x8x128xf32>
    %40 = vector.shape_cast %39 : vector<1x8x128xf32> to vector<8x128xf32>
    %41 = vector.shape_cast %38 : vector<8x128xf32> to vector<1x8x128xf32>
    tpu.vector_store %arg5[%c2_21, %c0_22, %c0_23], %41 {strides = array<i32>} : memref<3x8x128xf32, #tpu.memory_space<vmem>>, vector<1x8x128xf32>,
    %c0_i32_24 = arith.constant 0 : i32
    %42 = arith.cmpi eq, %arg1, %c0_i32_24 : i32
    %43 = arith.extui %42 : i1 to i32
    %c0_i32_25 = arith.constant 0 : i32
    %44 = arith.cmpi ne, %43, %c0_i32_25 : i32
    scf.if %44 {
      %c0_26 = arith.constant 0 : index
      %c0_27 = arith.constant 0 : index
      %c0_28 = arith.constant 0 : index
      %45 = vector.load %arg5[%c0_26, %c0_27, %c0_28] : memref<3x8x128xf32, #tpu.memory_space<vmem>>, vector<1x8x128xf32>
      %46 = vector.shape_cast %45 : vector<1x8x128xf32> to vector<8x128xf32>
      %47 = vector.shape_cast %46 : vector<8x128xf32> to vector<1x8x128xf32>
      %cst_29 = arith.constant dense<0.000000e+00> : vector<1xf32>
      %48 = vector.multi_reduction <add>, %47, %cst_29 [1, 2] : vector<1x8x128xf32> to vector<1xf32>
      %49 = vector.shape_cast %48 : vector<1xf32> to vector<1x1x1xf32>
      %50 = vector.extract %49[0, 0, 0] : f32 from vector<1x1x1xf32>
      %51 = vector.broadcast %50 : f32 to vector<8x128xf32>
      %c0_30 = arith.constant 0 : index
      %c0_31 = arith.constant 0 : index
      %c0_32 = arith.constant 0 : index
      %c0_33 = arith.constant 0 : index
      %52 = vector.load %arg4[%c0_30, %c0_31, %c0_32, %c0_33] : memref<1x3x8x128xf32, #tpu.memory_space<vmem>>, vector<1x1x8x128xf32>
      %53 = vector.shape_cast %52 : vector<1x1x8x128xf32> to vector<8x128xf32>
      %54 = vector.shape_cast %51 : vector<8x128xf32> to vector<1x1x8x128xf32>
      tpu.vector_store %arg4[%c0_30, %c0_31, %c0_32, %c0_33], %54 {strides = array<i32>} : memref<1x3x8x128xf32, #tpu.memory_space<vmem>>, vector<1x1x8x128xf32>,
      %c1_34 = arith.constant 1 : index
      %c0_35 = arith.constant 0 : index
      %c0_36 = arith.constant 0 : index
      %55 = vector.load %arg5[%c1_34, %c0_35, %c0_36] : memref<3x8x128xf32, #tpu.memory_space<vmem>>, vector<1x8x128xf32>
      %56 = vector.shape_cast %55 : vector<1x8x128xf32> to vector<8x128xf32>
      %57 = vector.shape_cast %56 : vector<8x128xf32> to vector<1x8x128xf32>
      %cst_37 = arith.constant dense<0.000000e+00> : vector<1xf32>
      %58 = vector.multi_reduction <add>, %57, %cst_37 [1, 2] : vector<1x8x128xf32> to vector<1xf32>
      %59 = vector.shape_cast %58 : vector<1xf32> to vector<1x1x1xf32>
      %60 = vector.extract %59[0, 0, 0] : f32 from vector<1x1x1xf32>
      %61 = vector.broadcast %60 : f32 to vector<8x128xf32>
      %c0_38 = arith.constant 0 : index
      %c1_39 = arith.constant 1 : index
      %c0_40 = arith.constant 0 : index
      %c0_41 = arith.constant 0 : index
      %62 = vector.load %arg4[%c0_38, %c1_39, %c0_40, %c0_41] : memref<1x3x8x128xf32, #tpu.memory_space<vmem>>, vector<1x1x8x128xf32>
      %63 = vector.shape_cast %62 : vector<1x1x8x128xf32> to vector<8x128xf32>
      %64 = vector.shape_cast %61 : vector<8x128xf32> to vector<1x1x8x128xf32>
      tpu.vector_store %arg4[%c0_38, %c1_39, %c0_40, %c0_41], %64 {strides = array<i32>} : memref<1x3x8x128xf32, #tpu.memory_space<vmem>>, vector<1x1x8x128xf32>,
      %c2_42 = arith.constant 2 : index
      %c0_43 = arith.constant 0 : index
      %c0_44 = arith.constant 0 : index
      %65 = vector.load %arg5[%c2_42, %c0_43, %c0_44] : memref<3x8x128xf32, #tpu.memory_space<vmem>>, vector<1x8x128xf32>
      %66 = vector.shape_cast %65 : vector<1x8x128xf32> to vector<8x128xf32>
      %67 = vector.shape_cast %66 : vector<8x128xf32> to vector<1x8x128xf32>
      %cst_45 = arith.constant dense<0.000000e+00> : vector<1xf32>
      %68 = vector.multi_reduction <add>, %67, %cst_45 [1, 2] : vector<1x8x128xf32> to vector<1xf32>
      %69 = vector.shape_cast %68 : vector<1xf32> to vector<1x1x1xf32>
      %70 = vector.extract %69[0, 0, 0] : f32 from vector<1x1x1xf32>
      %71 = vector.broadcast %70 : f32 to vector<8x128xf32>
      %c0_46 = arith.constant 0 : index
      %c2_47 = arith.constant 2 : index
      %c0_48 = arith.constant 0 : index
      %c0_49 = arith.constant 0 : index
      %72 = vector.load %arg4[%c0_46, %c2_47, %c0_48, %c0_49] : memref<1x3x8x128xf32, #tpu.memory_space<vmem>>, vector<1x1x8x128xf32>
      %73 = vector.shape_cast %72 : vector<1x1x8x128xf32> to vector<8x128xf32>
      %74 = vector.shape_cast %71 : vector<8x128xf32> to vector<1x1x8x128xf32>
      tpu.vector_store %arg4[%c0_46, %c2_47, %c0_48, %c0_49], %74 {strides = array<i32>} : memref<1x3x8x128xf32, #tpu.memory_space<vmem>>, vector<1x1x8x128xf32>,
    } else {
    }
    return
  }
  func.func @transform_0(%arg0: i32, %arg1: i32) -> (i32, i32) {
    %c1_i32 = arith.constant 1 : i32
    %0 = arith.muli %arg0, %c1_i32 : i32
    %1 = arith.addi %0, %arg1 : i32
    %c0_i32 = arith.constant 0 : i32
    %c0_i32_0 = arith.constant 0 : i32
    return %1, %c0_i32 : i32, i32
  }
  func.func @transform_1(%arg0: i32, %arg1: i32) -> (i32, i32) {
    %c1_i32 = arith.constant 1 : i32
    %0 = arith.muli %arg0, %c1_i32 : i32
    %1 = arith.addi %0, %arg1 : i32
    %c0_i32 = arith.constant 0 : i32
    %c0_i32_0 = arith.constant 0 : i32
    return %1, %c0_i32 : i32, i32
  }
  func.func @transform_2(%arg0: i32, %arg1: i32) -> (i32, i32, i32, i32) {
    %c0_i32 = arith.constant 0 : i32
    %c0_i32_0 = arith.constant 0 : i32
    %c0_i32_1 = arith.constant 0 : i32
    %c0_i32_2 = arith.constant 0 : i32
    return %arg0, %c0_i32, %c0_i32_0, %c0_i32_1 : i32, i32, i32, i32
  }
}

</mosaic_0001>

<llo_original>
// kernel: tpu_custom_call.1
$region0: #{tpu_custom_call.1}
  #allocation0 [shape = 'u32[]', space=smem, size = 0x4, offset = 0x4, fixed_abs, tag = 'smem constant byte address 0x4 - core index']
  #allocation1 [shape = 'u32[144,128]{1,0:T(1,128)}', space=vmem, size = 0x12000, scoped, tag = 'internal scratch']
  #allocation2 [shape = 'f32[3,8,128]{2,1,0:T(8,128)}', space=vmem, size = 0x3000, scoped, tag = 'scratch operand']
  %s0 = inlined_call_operand.hbm [shape: f32[16,128], index: 0, kind: input, shape index: {}]
  %s1 = inlined_call_operand.hbm [shape: f32[16,128], index: 1, kind: input, shape index: {}]
  %s2 = inlined_call_operand.hbm [shape: f32[2,3,8,128], index: 2, kind: output, shape index: {}]
  %s3 = sld [smem:[#allocation0]]
  $region57: #{tpu_custom_call.1} parent=0
    _
  %s5 = ssub.s32 1, %s3
  %s6 = scalar_select 0, %s5, %s3
  $region1: #{tpu_custom_call.1} parent=0
    #allocation3 [shape = 'u8[8192]{0}', space=vmem, size = 0x2000, scoped, tag = 'input window, operand 0']
    #allocation4 [shape = 's32[2]{0}', space=sflag, size = 0x8, scoped, tag = 'scoped memory for tpu_custom_call.1']
    #allocation5 [shape = 's32[2]{0}', space=sflag, size = 0x8, scoped, tag = 'scoped memory for tpu_custom_call.1']
    #allocation6 [shape = 'u8[8192]{0}', space=vmem, size = 0x2000, scoped, tag = 'input window, operand 1']
    #allocation7 [shape = 's32[2]{0}', space=sflag, size = 0x8, scoped, tag = 'scoped memory for tpu_custom_call.1']
    #allocation8 [shape = 'u8[24576]{0}', space=vmem, size = 0x6000, scoped, tag = 'output window, operand 0']
    %7 = vsyncpa [#allocation4], 0
    %s8 = scalar_lea.sflag [#allocation4], 1
    %9 = vsyncpa %s8, 0
    %10 = vsyncpa [#allocation7], 0
    %s11 = scalar_lea.sflag [#allocation7], 1
    %12 = vsyncpa %s11, 0
    %13 = vsyncpa [#allocation5], 0
    %s14 = scalar_lea.sflag [#allocation5], 1
    %15 = vsyncpa %s14, 0
    loop: start=0, step=1, limit=4
    $region2: #{tpu_custom_call.1} parent=1 // loop_pre_header
      _
    $region3: #{tpu_custom_call.1} parent=1 // loop_header
      %s17 = sphi 0, %s21
      %p18 = scmp.ge.s32.totalorder %s17, 4
      %s24 = sphi 0, %s36
      %s25 = sphi 0, %s32
      %s26 = sphi 0, %s24
      %s27 = sphi 0, %s25
      %s28 = sphi 0, %s26
      %s29 = sphi 0, %s27
      %s41 = sphi 0, %s43
      %s44 = sphi 0, %s41
      %s45 = sphi 0, %s44
      %s61 = sphi 0, %s45
      %s69 = sphi 0, %s71
      %s72 = sphi 0, %s69
      %s73 = sphi 0, %s72
      %s89 = sphi 0, %s73
      %s95 = sphi 0, %s97
      %s98 = sphi 0, %s95
      %s99 = sphi 0, %s98
      %s115 = sphi 0, %s99
    $region4: #{tpu_custom_call.1} parent=1 // loop_header_branch
      %20 = sbr.rel (%p18) target = $region8
    $region5: #{tpu_custom_call.1} parent=1 // loop_body
      %s22 = ssub.s32 %s17, 1
      %s23 = ssub.s32 %s17, 2
      %s30 = sadd.s32 1, %s25
      %p31 = scmp.ge.s32.totalorder %s30, 1
      %s32 = scalar_select %p31, 0, %s30
      %s33 = sadd.s32 1, %s24
      %s34 = scalar_select %p31, %s33, %s24
      %p35 = scmp.ge.s32.totalorder %s34, 2
      %s36 = scalar_select %p35, 0, %s34
      %s37 = sadd.s32 %s24, %s25
      %s38 = sadd.s32 %s36, %s32
      %s39 = ssub.s32 %s37, %s38
      %p40 = scmp.eq.s32.totalorder %s39, 0
      %s42 = sadd.s32 %s41, 1
      %s43 = scalar_select %p40, %s41, %s42
      %p46 = pneg %p40
      %p47 = scmp.eq.s32.totalorder %s17, 1
      %p48 = por %p46, %p47
      %p49 = scmp.ne.s32.totalorder %s41, %s44
      %p50 = scmp.eq.s32.totalorder %s17, 0
      %p51 = por %p49, %p50
      %p52 = scmp.ne.s32.totalorder %s41, %s44
      %p53 = scmp.eq.s32.totalorder %s22, 1
      %p54 = por %p52, %p53
      %p55 = scmp.ne.s32.totalorder %s44, %s45
      %p56 = scmp.eq.s32.totalorder %s22, 0
      %p57 = por %p55, %p56
      %p58 = scmp.ne.s32.totalorder %s44, %s45
      %p59 = scmp.eq.s32.totalorder %s23, 1
      %p60 = por %p58, %p59
      %p62 = scmp.ne.s32.totalorder %s45, %s61
      %p63 = scmp.eq.s32.totalorder %s23, 0
      %p64 = por %p62, %p63
      %s65 = sadd.s32 %s24, %s25
      %s66 = sadd.s32 %s36, %s32
      %s67 = ssub.s32 %s65, %s66
      %p68 = scmp.eq.s32.totalorder %s67, 0
      %s70 = sadd.s32 %s69, 1
      %s71 = scalar_select %p68, %s69, %s70
      %p74 = pneg %p68
      %p75 = scmp.eq.s32.totalorder %s17, 1
      %p76 = por %p74, %p75
      %p77 = scmp.ne.s32.totalorder %s69, %s72
      %p78 = scmp.eq.s32.totalorder %s17, 0
      %p79 = por %p77, %p78
      %p80 = scmp.ne.s32.totalorder %s69, %s72
      %p81 = scmp.eq.s32.totalorder %s22, 1
      %p82 = por %p80, %p81
      %p83 = scmp.ne.s32.totalorder %s72, %s73
      %p84 = scmp.eq.s32.totalorder %s22, 0
      %p85 = por %p83, %p84
      %p86 = scmp.ne.s32.totalorder %s72, %s73
      %p87 = scmp.eq.s32.totalorder %s23, 1
      %p88 = por %p86, %p87
      %p90 = scmp.ne.s32.totalorder %s73, %s89
      %p91 = scmp.eq.s32.totalorder %s23, 0
      %p92 = por %p90, %p91
      %s93 = ssub.s32 %s24, %s36
      %p94 = scmp.eq.s32.totalorder %s93, 0
      %s96 = sadd.s32 %s95, 1
      %s97 = scalar_select %p94, %s95, %s96
      %p100 = pneg %p94
      %p101 = scmp.eq.s32.totalorder %s17, 1
      %p102 = por %p100, %p101
      %p103 = scmp.ne.s32.totalorder %s95, %s98
      %p104 = scmp.eq.s32.totalorder %s17, 0
      %p105 = por %p103, %p104
      %p106 = scmp.ne.s32.totalorder %s95, %s98
      %p107 = scmp.eq.s32.totalorder %s22, 1
      %p108 = por %p106, %p107
      %p109 = scmp.ne.s32.totalorder %s98, %s99
      %p110 = scmp.eq.s32.totalorder %s22, 0
      %p111 = por %p109, %p110
      %p112 = scmp.ne.s32.totalorder %s98, %s99
      %p113 = scmp.eq.s32.totalorder %s23, 1
      %p114 = por %p112, %p113
      %p116 = scmp.ne.s32.totalorder %s99, %s115
      %p117 = scmp.eq.s32.totalorder %s23, 0
      %p118 = por %p116, %p117
      %p119 = scmp.le.s32.totalorder 1, %s17
      %p120 = scmp.lt.s32.totalorder %s17, 3
      %p121 = pnand %p119, %p120
      %p122 = pneg %p121
      // Predicated region
      $region9: #{tpu_custom_call.1} parent=5 // pred_check
        _
      $region10: #{tpu_custom_call.1} parent=5 // pred_check_branch
        %124 = sbr.rel (%p121) target = $region12
      $region11: #{tpu_custom_call.1} parent=5 // pred_region
        %s125 = ssub.s32 %s17, 1
      $region12: #{tpu_custom_call.1} parent=5 // pred_fallthru
        _
      %p126 = scmp.lt.s32.totalorder %s17, 2
      // Predicated region
      $region13: #{tpu_custom_call.1} parent=5 // pred_check
        %p127 = pneg %p126
      $region14: #{tpu_custom_call.1} parent=5 // pred_check_branch
        %129 = sbr.rel (%p127) target = $region16
      $region15: #{tpu_custom_call.1} parent=5 // pred_region
        // Predicated region
        $region17: #{tpu_custom_call.1} parent=15 // pred_check
          %p130 = pneg %p51
        $region18: #{tpu_custom_call.1} parent=15 // pred_check_branch
          %132 = sbr.rel (%p130) target = $region20
        $region19: #{tpu_custom_call.1} parent=15 // pred_region
          %s133 = sand.u32 %s41, 1
          %s134 = scalar_lea.sflag [#allocation4], %s133
          %s135 = sand.u32 %s41, 1
          %s136 = smul.addr %s135, 8
          %s137 = scalar_lea.vmem [#allocation3], %s136
          %s138 = sadd.s32 %s24, %s25
          %s140 = ssub.s32 128, 128
          %141 = vsyncadd %s134, %s140
          %s142 = smul.addr %s138, 128
          %s143 = scalar_lea.hbm %s0, %s142
          %s145 = sshll.u32 %s137, 4
          %s146 = int_to_ptr.vmem [resolvable:$true] %s145
          %148 = dma.hbm_to_vmem [thread:$0]  %s143, 128, %s146, %s134
        $region20: #{tpu_custom_call.1} parent=15 // pred_fallthru
          _
        // Predicated region
        $region21: #{tpu_custom_call.1} parent=15 // pred_check
          %p149 = pneg %p79
        $region22: #{tpu_custom_call.1} parent=15 // pred_check_branch
          %151 = sbr.rel (%p149) target = $region24
        $region23: #{tpu_custom_call.1} parent=15 // pred_region
          %s152 = sand.u32 %s69, 1
          %s153 = scalar_lea.sflag [#allocation7], %s152
          %s154 = sand.u32 %s69, 1
          %s155 = smul.addr %s154, 8
          %s156 = scalar_lea.vmem [#allocation6], %s155
          %s157 = sadd.s32 %s24, %s25
          %s159 = ssub.s32 128, 128
          %160 = vsyncadd %s153, %s159
          %s161 = smul.addr %s157, 128
          %s162 = scalar_lea.hbm %s1, %s161
          %s164 = sshll.u32 %s156, 4
          %s165 = int_to_ptr.vmem [resolvable:$true] %s164
          %167 = dma.hbm_to_vmem [thread:$0]  %s162, 128, %s165, %s153
        $region24: #{tpu_custom_call.1} parent=15 // pred_fallthru
          _
      $region16: #{tpu_custom_call.1} parent=5 // pred_fallthru
        _
      %p168 = scmp.le.s32.totalorder 1, %s17
      %p169 = scmp.lt.s32.totalorder %s17, 3
      %p170 = pnand %p168, %p169
      %p171 = pneg %p170
      // Predicated region
      $region25: #{tpu_custom_call.1} parent=5 // pred_check
        _
      $region26: #{tpu_custom_call.1} parent=5 // pred_check_branch
        %173 = sbr.rel (%p170) target = $region28
      $region27: #{tpu_custom_call.1} parent=5 // pred_region
        %s174 = ssub.s32 %s17, 1
        %s175 = sand.u32 %s44, 1
        %s176 = scalar_lea.sflag [#allocation4], %s175
        %s177 = sand.u32 %s44, 1
        %s178 = smul.addr %s177, 8
        %s179 = scalar_lea.vmem [#allocation3], %s178
        // Predicated region
        $region29: #{tpu_custom_call.1} parent=27 // pred_check
          %p180 = pneg %p57
        $region30: #{tpu_custom_call.1} parent=27 // pred_check_branch
          %182 = sbr.rel (%p180) target = $region32
        $region31: #{tpu_custom_call.1} parent=27 // pred_region
          %183 = dma.done %s176, 128
        $region32: #{tpu_custom_call.1} parent=27 // pred_fallthru
          _
        %s184 = sand.u32 %s72, 1
        %s185 = scalar_lea.sflag [#allocation7], %s184
        %s186 = sand.u32 %s72, 1
        %s187 = smul.addr %s186, 8
        %s188 = scalar_lea.vmem [#allocation6], %s187
        // Predicated region
        $region33: #{tpu_custom_call.1} parent=27 // pred_check
          %p189 = pneg %p85
        $region34: #{tpu_custom_call.1} parent=27 // pred_check_branch
          %191 = sbr.rel (%p189) target = $region36
        $region35: #{tpu_custom_call.1} parent=27 // pred_region
          %192 = dma.done %s185, 128
        $region36: #{tpu_custom_call.1} parent=27 // pred_fallthru
          _
        %s193 = sand.u32 %s44, 1
        %s194 = scalar_lea.sflag [#allocation4], %s193
        %s195 = sand.u32 %s44, 1
        %s196 = smul.addr %s195, 8
        %s197 = scalar_lea.vmem [#allocation3], %s196
        %p198 = pneg %p57
        %p199 = pneg %p54
        %s200 = sand.u32 %s72, 1
        %s201 = scalar_lea.sflag [#allocation7], %s200
        %s202 = sand.u32 %s72, 1
        %s203 = smul.addr %s202, 8
        %s204 = scalar_lea.vmem [#allocation6], %s203
        %p205 = pneg %p85
        %p206 = pneg %p82
        %p207 = pneg %p111
        %p208 = pneg %p108
        %s209 = sand.u32 %s98, 1
        %s210 = scalar_lea.sflag [#allocation5], %s209
        %s211 = sand.u32 %s98, 1
        %s212 = smul.addr %s211, 24
        %s213 = scalar_lea.vmem [#allocation8], %s212
        %s214 = sadd.s32 %s26, %s27
        %s215 = sadd.s32 %s26, %s27
        %p216 = scmp.eq.s32.totalorder %s27, 0
        // Predicated region
        $region37: #{tpu_custom_call.1} parent=27 // pred_check
          %p217 = pneg %p216
        $region38: #{tpu_custom_call.1} parent=27 // pred_check_branch
          %219 = sbr.rel (%p217) target = $region40
        $region39: #{tpu_custom_call.1} parent=27 // pred_region
          %220 = vst [vmem:[#allocation2] sm:$0xff] 0.0
          %221 = vst [vmem:[#allocation2 + $0x8] sm:$0xff] 0.0
          %222 = vst [vmem:[#allocation2 + $0x10] sm:$0xff] 0.0
        $region40: #{tpu_custom_call.1} parent=27 // pred_fallthru
          _
        %v223 = vld [vmem:[%s179] sm:$0xff]
        %v224 = vld [vmem:[%s188] sm:$0xff]
        %v225 = vand.u32 2147483647, %v223
        %v226 = vsub.f32 0.0, %v225
        %v227 = vmul.f32 %v226, 1.442695
        %v228 = vpow.pop %v227
        %v229 = vmax.f32 %v223, 0.0
        %v230 = vmul.f32 %v223, %v224
        %v231 = vsub.f32 %v229, %v230
        %v232 = vadd.f32 %v228, 1.0
        %v233 = vlog2.pop %v232
        %v234 = vmul.f32 %v233, 0.6931472
        %v235 = vmul.f32 -0.5, %v228
        %v236 = vadd.f32 %v235, 1.0
        %v237 = vmul.f32 %v236, %v228
        %v238 = vand.u32 2147483647, %v228
        %vm239 = vcmp.lt.f32.partialorder %v238, 0.0004427343
        %v240 = vsel %vm239, %v237, %v234
        %v241 = vadd.f32 %v231, %v240
        %vm242 = vcmp.ge.f32.partialorder %v223, 0.0
        %v243 = vsel %vm242, 1.0, %v228
        %v244 = vadd.f32 %v228, 1.0
        %v245 = vrcp.pop %v244
        %v246 = vmul.f32 %v243, %v245
        %v247 = vld [vmem:[#allocation2] sm:$0xff]
        %v248 = vadd.f32 %v247, %v241
        %249 = vst [vmem:[#allocation2] sm:$0xff] %v248
        %s250 = scalar_lea.vmem [#allocation2], 8
        %v251 = vld [vmem:[%s250] sm:$0xff]
        %v252 = vmul.f32 %v246, %v224
        %v253 = vadd.f32 %v251, %v252
        %254 = vst [vmem:[%s250] sm:$0xff] %v253
        %s255 = scalar_lea.vmem [#allocation2], 16
        %v256 = vld [vmem:[%s255] sm:$0xff]
        %v257 = vadd.f32 %v246, %v224
        %v258 = vadd.f32 %v256, %v257
        %259 = vst [vmem:[%s255] sm:$0xff] %v258
        // Predicated region
        $region41: #{tpu_custom_call.1} parent=27 // pred_check
          %p260 = pneg %p216
        $region42: #{tpu_custom_call.1} parent=27 // pred_check_branch
          %262 = sbr.rel (%p260) target = $region44
        $region43: #{tpu_custom_call.1} parent=27 // pred_region
          %v263 = vld [vmem:[#allocation2] sm:$0xff]
          %264 = vadd.xlane.f32.xlu0 %v263
          %v265 = vpop.xlane.xlu0 %264
          %v266 = vrot.slane %v265, 4
          %v267 = vadd.f32 %v265, %v266
          %v268 = vrot.slane %v267, 2
          %v269 = vadd.f32 %v267, %v268
          %v270 = vrot.slane %v269, 1
          %v271 = vadd.f32 %v269, %v270
          %s272 = vtos %v271
          %v273 = vstv %s272
          %274 = vst [vmem:[%s213] sm:$0xff] %v273
          %v275 = vld [vmem:[%s250] sm:$0xff]
          %276 = vadd.xlane.f32.xlu0 %v275
          %v277 = vpop.xlane.xlu0 %276
          %v278 = vrot.slane %v277, 4
          %v279 = vadd.f32 %v277, %v278
          %v280 = vrot.slane %v279, 2
          %v281 = vadd.f32 %v279, %v280
          %v282 = vrot.slane %v281, 1
          %v283 = vadd.f32 %v281, %v282
          %s284 = vtos %v283
          %v285 = vstv %s284
          %s286 = scalar_lea.vmem %s213, 8 [#allocation8]
          %287 = vst [vmem:[%s286] sm:$0xff] %v285
          %v288 = vld [vmem:[%s255] sm:$0xff]
          %289 = vadd.xlane.f32.xlu0 %v288
          %v290 = vpop.xlane.xlu0 %289
          %v291 = vrot.slane %v290, 4
          %v292 = vadd.f32 %v290, %v291
          %v293 = vrot.slane %v292, 2
          %v294 = vadd.f32 %v292, %v293
          %v295 = vrot.slane %v294, 1
          %v296 = vadd.f32 %v294, %v295
          %s297 = vtos %v296
          %v298 = vstv %s297
          %s299 = scalar_lea.vmem %s213, 16 [#allocation8]
          %300 = vst [vmem:[%s299] sm:$0xff] %v298
        $region44: #{tpu_custom_call.1} parent=27 // pred_fallthru
          _
        %s301 = sand.u32 %s98, 1
        %s302 = scalar_lea.sflag [#allocation5], %s301
        %s303 = sand.u32 %s98, 1
        %s304 = smul.addr %s303, 24
        %s305 = scalar_lea.vmem [#allocation8], %s304
        // Predicated region
        $region45: #{tpu_custom_call.1} parent=27 // pred_check
          %p306 = pneg %p108
        $region46: #{tpu_custom_call.1} parent=27 // pred_check_branch
          %308 = sbr.rel (%p306) target = $region48
        $region47: #{tpu_custom_call.1} parent=27 // pred_region
          %s310 = ssub.s32 384, 384
          %311 = vsyncadd %s302, %s310
          %s312 = smul.addr %s26, 3
          %s313 = smul.addr %s312, 128
          %s314 = scalar_lea.hbm %s2, %s313
          %s315 = sshll.u32 %s305, 4
          %s316 = int_to_ptr.vmem [resolvable:$true] %s315
          %321 = dma.vmem_to_hbm [thread:$0]  %s316, 384, %s314, %s302, 128, 128, 8
        $region48: #{tpu_custom_call.1} parent=27 // pred_fallthru
          _
      $region28: #{tpu_custom_call.1} parent=5 // pred_fallthru
        _
      %p322 = scmp.le.s32.totalorder 2, %s17
      // Predicated region
      $region49: #{tpu_custom_call.1} parent=5 // pred_check
        %p323 = pneg %p322
      $region50: #{tpu_custom_call.1} parent=5 // pred_check_branch
        %325 = sbr.rel (%p323) target = $region52
      $region51: #{tpu_custom_call.1} parent=5 // pred_region
        %s326 = ssub.s32 %s17, 2
        // Predicated region
        $region53: #{tpu_custom_call.1} parent=51 // pred_check
          %p327 = pneg %p114
        $region54: #{tpu_custom_call.1} parent=51 // pred_check_branch
          %329 = sbr.rel (%p327) target = $region56
        $region55: #{tpu_custom_call.1} parent=51 // pred_region
          %s330 = sand.u32 %s99, 1
          %s331 = scalar_lea.sflag [#allocation5], %s330
          %s332 = sand.u32 %s99, 1
          %s333 = smul.addr %s332, 24
          %s334 = scalar_lea.vmem [#allocation8], %s333
          %335 = dma.done %s331, 384
        $region56: #{tpu_custom_call.1} parent=51 // pred_fallthru
          _
      $region52: #{tpu_custom_call.1} parent=5 // pred_fallthru
        _
    $region6: #{tpu_custom_call.1} parent=1 // loop_footer
      %s21 = sadd.s32 1, %s17
    $region7: #{tpu_custom_call.1} parent=1 // loop_footer_branch
      %16 = sbr.rel target = $region3
    $region8: #{tpu_custom_call.1} parent=1 // loop_exit
      _
    %336 = vsyncpa [#allocation4], 1
    %s337 = scalar_lea.sflag [#allocation4], 1
    %338 = vsyncpa %s337, 1
    %339 = vsyncpa [#allocation7], 1
    %s340 = scalar_lea.sflag [#allocation7], 1
    %341 = vsyncpa %s340, 1
    %342 = vsyncpa [#allocation5], 1
    %s343 = scalar_lea.sflag [#allocation5], 1
    %344 = vsyncpa %s343, 1

</llo_original>
